<compile_context>
chip_gen: v7x
topology: tpu7x:2x2x1
jax: 0.10.0
libtpu: 0.0.40
codegen_flags: <defaults>
</compile_context>

<pallas_src>
import functools

import jax
import jax.numpy as jnp
from jax.experimental import pallas as pl
from jax.experimental.pallas import tpu as pltpu

MASK_VALUE = -1000.0


def _round_up(n, m):
    return ((n + m - 1) // m) * m


def _pick_tile(padded, candidates):
    for c in candidates:
        if padded % c == 0:
            return c
    return candidates[-1]


def _incremental_classifier_kernel(x_ref, w_ref, b_ref, au_ref, o_ref, acc_ref,
                                   *, masking, mask_value):
    k = pl.program_id(2)

    @pl.when(k == 0)
    def _init():
        acc_ref[...] = jnp.zeros_like(acc_ref)

    # (tm, tk) x (tn, tk) contracted on F -> (tm, tn); f32 accumulation on MXU.
    acc_ref[...] += jax.lax.dot_general(
        x_ref[...], w_ref[...],
        dimension_numbers=(((1,), (1,)), ((), ())),
        preferred_element_type=jnp.float32)

    @pl.when(k == pl.num_programs(2) - 1)
    def _finalize():
        out = acc_ref[...] + b_ref[...]
        if masking:  # static Python branch: no wasted VPU work when masking=False
            out = jnp.where(au_ref[...] == 0, jnp.float32(mask_value), out)
        o_ref[...] = out.astype(o_ref.dtype)


def incremental_classifier_forward(x, weight, bias, active_units, *,
                                   masking=True, mask_value=MASK_VALUE,
                                   compute_dtype=None, force_pallas=False):
    """x: (B, F); weight: (C, F); bias: (C,); active_units: (C,) int8."""
    B, F = x.shape
    C, F_w = weight.shape
    assert F == F_w, "weight in_features mismatch"
    out_dtype = x.dtype

    # Tiny shapes: pallas_call fixed overhead exceeds the whole compute; let
    # XLA fuse matmul + bias + select in one pass.
    if not force_pallas and (B * F * C) < (128 * 128 * 128):
        out = x @ weight.T + bias
        if masking:
            out = jnp.where(active_units[None, :] == 0,
                            jnp.asarray(mask_value, out.dtype), out)
        return out.astype(out_dtype)

    if compute_dtype is not None:
        x = x.astype(compute_dtype)
        weight = weight.astype(compute_dtype)

    # Pad to TPU-friendly shapes (lane-dense output, MXU-aligned K).
    Bp = _round_up(B, 8)
    Fp = _round_up(F, 128)
    Cp = _round_up(C, 128)

    if Bp >= 256:
        Bp = _round_up(B, 256)
        tm = 256
    else:
        tm = Bp
    tn = _pick_tile(Cp, (512, 256, 128))
    tk = _pick_tile(Fp, (512, 256, 128))

    xp = jnp.pad(x, ((0, Bp - B), (0, Fp - F)))
    wp = jnp.pad(weight, ((0, Cp - C), (0, Fp - F)))
    bp = jnp.pad(bias.astype(jnp.float32), (0, Cp - C)).reshape(1, Cp)
    # Padded columns stay 0 (inactive) -> masked; they are sliced off anyway.
    aup = jnp.pad(active_units.astype(jnp.int32), (0, Cp - C)).reshape(1, Cp)

    grid = (Bp // tm, Cp // tn, Fp // tk)

    # Explicit VMEM budget: double-buffered x/w/out tiles + f32 accumulator.
    itemsize = jnp.dtype(xp.dtype).itemsize
    vmem_bytes = (2 * (tm * tk * itemsize + tn * tk * itemsize + tm * tn * 4)
                  + tm * tn * 4 + 4 * 2 * tn * 4)
    vmem_limit = int(min(max(3 * vmem_bytes, 16 * 1024 * 1024),
                         48 * 1024 * 1024))

    kernel = functools.partial(_incremental_classifier_kernel,
                               masking=bool(masking),
                               mask_value=float(mask_value))

    out_padded = pl.pallas_call(
        kernel,
        out_shape=jax.ShapeDtypeStruct((Bp, Cp), jnp.float32),
        grid_spec=pltpu.PrefetchScalarGridSpec(
            num_scalar_prefetch=0,
            grid=grid,
            in_specs=[
                pl.BlockSpec((tm, tk), lambda i, j, k: (i, k)),   # x      (Bp, Fp)
                pl.BlockSpec((tn, tk), lambda i, j, k: (j, k)),   # weight (Cp, Fp)
                pl.BlockSpec((1, tn), lambda i, j, k: (0, j)),    # bias   (1, Cp)
                pl.BlockSpec((1, tn), lambda i, j, k: (0, j)),    # active (1, Cp)
            ],
            out_specs=pl.BlockSpec((tm, tn), lambda i, j, k: (i, j)),
            scratch_shapes=[pltpu.VMEM((tm, tn), jnp.float32)],
        ),
        compiler_params=pltpu.CompilerParams(
            dimension_semantics=("parallel", "parallel", "arbitrary"),
            vmem_limit_bytes=vmem_limit,
        ),
    )(xp, wp, bp, aup)

    return out_padded[:B, :C].astype(out_dtype)


def _run_case(kx, kw, kb, B, F, C, n_active):
    bound = 1.0 / (F ** 0.5)
    weight = jax.random.uniform(kw, (C, F), minval=-bound, maxval=bound,
                                dtype=jnp.float32)
    bias = jax.random.uniform(kb, (C,), minval=-bound, maxval=bound,
                              dtype=jnp.float32)
    # active_units buffer: zeros at __init__; mark the first n_active classes
    # as "seen" (as adaptation() would) to exercise both masked/unmasked paths.
    active_units = jnp.zeros((C,), dtype=jnp.int8).at[:n_active].set(1)
    x = jax.random.normal(kx, (B, F), dtype=jnp.float32)

    out = incremental_classifier_forward(x, weight, bias, active_units,
                                         masking=True, force_pallas=True)
    out = jax.block_until_ready(out)

    ref = x @ weight.T + bias
    ref = jnp.where(active_units[None, :] == 0, MASK_VALUE, ref)
    assert out.shape == ref.shape
    assert jnp.allclose(out, ref, atol=1e-4, rtol=1e-4), "mismatch vs reference"


if __name__ == "__main__":
    key = jax.random.PRNGKey(0)
    kx1, kw1, kb1, kx2, kw2, kb2 = jax.random.split(key, 6)

    # Small config: IncrementalClassifier(in_features=32, initial_out_features=8)
    _run_case(kx1, kw1, kb1, B=8, F=32, C=8, n_active=4)
    # Larger config: exercises K accumulation (3 steps), class padding (200->256),
    # and the masked/unmasked split across a wide head.
    _run_case(kx2, kw2, kb2, B=16, F=384, C=200, n_active=130)

    print("KERNEL_OK")
</pallas_src>

<mosaic_0001>
module attributes {stable_mosaic.version = 11 : i64} {
  func.func @_incremental_classifier_kernel(%arg0: i32, %arg1: i32, %arg2: i32, %arg3: memref<8x128xf32, #tpu.memory_space<vmem>>, %arg4: memref<128x128xf32, #tpu.memory_space<vmem>>, %arg5: memref<1x128xf32, #tpu.memory_space<vmem>>, %arg6: memref<1x128xi32, #tpu.memory_space<vmem>>, %arg7: memref<8x128xf32, #tpu.memory_space<vmem>>, %arg8: memref<8x128xf32, #tpu.memory_space<vmem>>) attributes {dimension_semantics = [#tpu.dimension_semantics<parallel>, #tpu.dimension_semantics<parallel>, #tpu.dimension_semantics<arbitrary>], iteration_bounds = array<i64: 1, 1, 1>, scalar_prefetch = 0 : i64, scratch_operands = 1 : i64, tpu.core_type = #tpu.core_type<tc>, window_params = [{transform_indices = @transform_0, window_bounds = array<i64: 8, 128>}, {transform_indices = @transform_1, window_bounds = array<i64: 128, 128>}, {transform_indices = @transform_2, window_bounds = array<i64: 1, 128>}, {transform_indices = @transform_3, window_bounds = array<i64: 1, 128>}, {transform_indices = @transform_4, window_bounds = array<i64: 8, 128>}]} {
    %c0_i32 = arith.constant 0 : i32
    %0 = arith.cmpi eq, %arg2, %c0_i32 : i32
    %1 = arith.extui %0 : i1 to i32
    %c0_i32_0 = arith.constant 0 : i32
    %2 = arith.cmpi ne, %1, %c0_i32_0 : i32
    scf.if %2 {
      %cst_10 = arith.constant 0.000000e+00 : f32
      %12 = vector.broadcast %cst_10 : f32 to vector<8x128xf32>
      %c0_11 = arith.constant 0 : index
      %c0_12 = arith.constant 0 : index
      %13 = vector.load %arg8[%c0_11, %c0_12] : memref<8x128xf32, #tpu.memory_space<vmem>>, vector<8x128xf32>
      tpu.vector_store %arg8[%c0_11, %c0_12], %12 {strides = array<i32>} : memref<8x128xf32, #tpu.memory_space<vmem>>, vector<8x128xf32>,
    } else {
    }
    %c0 = arith.constant 0 : index
    %c0_1 = arith.constant 0 : index
    %3 = vector.load %arg8[%c0, %c0_1] : memref<8x128xf32, #tpu.memory_space<vmem>>, vector<8x128xf32>
    %c0_2 = arith.constant 0 : index
    %c0_3 = arith.constant 0 : index
    %4 = vector.load %arg3[%c0_2, %c0_3] : memref<8x128xf32, #tpu.memory_space<vmem>>, vector<8x128xf32>
    %c0_4 = arith.constant 0 : index
    %c0_5 = arith.constant 0 : index
    %5 = vector.load %arg4[%c0_4, %c0_5] : memref<128x128xf32, #tpu.memory_space<vmem>>, vector<128x128xf32>
    %cst = arith.constant dense<0.000000e+00> : vector<8x128xf32>
    %6 = tpu.matmul %4, %5, %cst {dimension_numbers = #tpu.dot_dimension_numbers<[1], [1], [0], [0], [0, 0, 1, 0], [], []>} : vector<8x128xf32>, vector<128x128xf32>, vector<8x128xf32> -> vector<8x128xf32>
    %7 = arith.addf %3, %6 : vector<8x128xf32>
    %c0_6 = arith.constant 0 : index
    %c0_7 = arith.constant 0 : index
    %8 = vector.load %arg8[%c0_6, %c0_7] : memref<8x128xf32, #tpu.memory_space<vmem>>, vector<8x128xf32>
    tpu.vector_store %arg8[%c0_6, %c0_7], %7 {strides = array<i32>} : memref<8x128xf32, #tpu.memory_space<vmem>>, vector<8x128xf32>,
    %c0_i32_8 = arith.constant 0 : i32
    %9 = arith.cmpi eq, %arg2, %c0_i32_8 : i32
    %10 = arith.extui %9 : i1 to i32
    %c0_i32_9 = arith.constant 0 : i32
    %11 = arith.cmpi ne, %10, %c0_i32_9 : i32
    scf.if %11 {
      %c0_10 = arith.constant 0 : index
      %c0_11 = arith.constant 0 : index
      %12 = vector.load %arg8[%c0_10, %c0_11] : memref<8x128xf32, #tpu.memory_space<vmem>>, vector<8x128xf32>
      %c0_12 = arith.constant 0 : index
      %c0_13 = arith.constant 0 : index
      %13 = vector.load %arg5[%c0_12, %c0_13] : memref<1x128xf32, #tpu.memory_space<vmem>>, vector<1x128xf32>
      %14 = vector.broadcast %13 : vector<1x128xf32> to vector<8x128xf32>
      %15 = arith.addf %12, %14 : vector<8x128xf32>
      %c0_14 = arith.constant 0 : index
      %c0_15 = arith.constant 0 : index
      %16 = vector.load %arg6[%c0_14, %c0_15] : memref<1x128xi32, #tpu.memory_space<vmem>>, vector<1x128xi32>
      %c0_i32_16 = arith.constant 0 : i32
      %17 = vector.broadcast %c0_i32_16 : i32 to vector<1x128xi32>
      %18 = arith.cmpi eq, %16, %17 : vector<1x128xi32>
      %cst_17 = arith.constant -1.000000e+03 : f32
      %19 = vector.shape_cast %18 : vector<1x128xi1> to vector<1x128xi1>
      %20 = vector.broadcast %19 : vector<1x128xi1> to vector<8x128xi1>
      %21 = vector.broadcast %cst_17 : f32 to vector<8x128xf32>
      %22 = arith.select %20, %21, %15 : vector<8x128xi1>, vector<8x128xf32>
      %c0_18 = arith.constant 0 : index
      %c0_19 = arith.constant 0 : index
      %23 = vector.load %arg7[%c0_18, %c0_19] : memref<8x128xf32, #tpu.memory_space<vmem>>, vector<8x128xf32>
      tpu.vector_store %arg7[%c0_18, %c0_19], %22 {strides = array<i32>} : memref<8x128xf32, #tpu.memory_space<vmem>>, vector<8x128xf32>,
    } else {
    }
    return
  }
  func.func @transform_0(%arg0: i32, %arg1: i32, %arg2: i32) -> (i32, i32) {
    %c0_i32 = arith.constant 0 : i32
    return %arg0, %arg2 : i32, i32
  }
  func.func @transform_1(%arg0: i32, %arg1: i32, %arg2: i32) -> (i32, i32) {
    %c0_i32 = arith.constant 0 : i32
    return %arg1, %arg2 : i32, i32
  }
  func.func @transform_2(%arg0: i32, %arg1: i32, %arg2: i32) -> (i32, i32) {
    %c0_i32 = arith.constant 0 : i32
    %c0_i32_0 = arith.constant 0 : i32
    return %c0_i32, %arg1 : i32, i32
  }
  func.func @transform_3(%arg0: i32, %arg1: i32, %arg2: i32) -> (i32, i32) {
    %c0_i32 = arith.constant 0 : i32
    %c0_i32_0 = arith.constant 0 : i32
    return %c0_i32, %arg1 : i32, i32
  }
  func.func @transform_4(%arg0: i32, %arg1: i32, %arg2: i32) -> (i32, i32) {
    %c0_i32 = arith.constant 0 : i32
    return %arg0, %arg1 : i32, i32
  }
}

</mosaic_0001>

<llo_original>
// kernel: tpu_custom_call.1
$region0: #{tpu_custom_call.1}
  #allocation0 [shape = 'u32[]', space=smem, size = 0x4, offset = 0x4, fixed_abs, tag = 'smem constant byte address 0x4 - core index']
  #allocation1 [shape = 'u32[144,128]{1,0:T(1,128)}', space=vmem, size = 0x12000, scoped, tag = 'internal scratch']
  #allocation2 [shape = 'f32[8,128]{1,0:T(8,128)}', space=vmem, size = 0x1000, scoped, tag = 'scratch operand']
  %s0 = inlined_call_operand.hbm [shape: f32[8,128], index: 0, kind: input, shape index: {}]
  %s1 = inlined_call_operand.hbm [shape: f32[128,128], index: 1, kind: input, shape index: {}]
  %s2 = inlined_call_operand.vmem [shape: f32[1,128], index: 2, kind: input, shape index: {}]
  %s3 = inlined_call_operand.vmem [shape: s32[1,128], index: 3, kind: input, shape index: {}]
  %s4 = inlined_call_operand.hbm [shape: f32[8,128], index: 4, kind: output, shape index: {}]
  %s5 = sld [smem:[#allocation0]]
  $region42: #{tpu_custom_call.1} parent=0
    _
  %s7 = ssub.s32 1, %s5
  %s8 = scalar_select 0, %s7, %s5
  $region1: #{tpu_custom_call.1} parent=0
    #allocation3 [shape = 'u8[4096]{0}', space=vmem, size = 0x1000, scoped, tag = 'input window, operand 0, single buffered']
    #allocation4 [shape = 's32[1]{0}', space=sflag, size = 0x4, scoped, tag = 'scoped memory for tpu_custom_call.1']
    #allocation5 [shape = 's32[1]{0}', space=sflag, size = 0x4, scoped, tag = 'scoped memory for tpu_custom_call.1']
    #allocation6 [shape = 'u8[65536]{0}', space=vmem, size = 0x10000, scoped, tag = 'input window, operand 1, single buffered']
    #allocation7 [shape = 's32[1]{0}', space=sflag, size = 0x4, scoped, tag = 'scoped memory for tpu_custom_call.1']
    #allocation8 [shape = 'u8[4096]{0}', space=vmem, size = 0x1000, scoped, tag = 'output window, operand 0, single buffered']
    %9 = vsyncpa [#allocation4], 0
    %10 = vsyncpa [#allocation7], 0
    %11 = vsyncpa [#allocation5], 0
    // Predicated region
    $region2: #{tpu_custom_call.1} parent=1 // pred_check
      _
    $region3: #{tpu_custom_call.1} parent=1 // pred_check_branch
      %13 = sbr.rel (0) target = $region5
    $region4: #{tpu_custom_call.1} parent=1 // pred_region
      %s15 = ssub.s32 128, 128
      %16 = vsyncadd [#allocation4], %s15
      %s18 = sshll.u32 [#allocation3], 4
      %s19 = int_to_ptr.vmem [resolvable:$true] %s18
      %21 = dma.hbm_to_vmem [thread:$0]  %s0, 128, %s19, [#allocation4]
    $region5: #{tpu_custom_call.1} parent=1 // pred_fallthru
      _
    // Predicated region
    $region6: #{tpu_custom_call.1} parent=1 // pred_check
      _
    $region7: #{tpu_custom_call.1} parent=1 // pred_check_branch
      %23 = sbr.rel (0) target = $region9
    $region8: #{tpu_custom_call.1} parent=1 // pred_region
      %s25 = ssub.s32 2048, 2048
      %26 = vsyncadd [#allocation7], %s25
      %s27 = sshll.u32 [#allocation6], 4
      %s28 = int_to_ptr.vmem [resolvable:$true] %s27
      %33 = dma.hbm_to_vmem [thread:$0]  %s1, 2048, %s28, [#allocation7], 128, 128, 8
    $region9: #{tpu_custom_call.1} parent=1 // pred_fallthru
      _
    // Predicated region
    $region10: #{tpu_custom_call.1} parent=1 // pred_check
      _
    $region11: #{tpu_custom_call.1} parent=1 // pred_check_branch
      %35 = sbr.rel (0) target = $region13
    $region12: #{tpu_custom_call.1} parent=1 // pred_region
      _
    $region13: #{tpu_custom_call.1} parent=1 // pred_fallthru
      _
    // Predicated region
    $region14: #{tpu_custom_call.1} parent=1 // pred_check
      _
    $region15: #{tpu_custom_call.1} parent=1 // pred_check_branch
      %37 = sbr.rel (0) target = $region17
    $region16: #{tpu_custom_call.1} parent=1 // pred_region
      _
    $region17: #{tpu_custom_call.1} parent=1 // pred_fallthru
      _
    // Predicated region
    $region18: #{tpu_custom_call.1} parent=1 // pred_check
      _
    $region19: #{tpu_custom_call.1} parent=1 // pred_check_branch
      %39 = sbr.rel (0) target = $region21
    $region20: #{tpu_custom_call.1} parent=1 // pred_region
      %40 = dma.done [#allocation4], 128
    $region21: #{tpu_custom_call.1} parent=1 // pred_fallthru
      _
    // Predicated region
    $region22: #{tpu_custom_call.1} parent=1 // pred_check
      _
    $region23: #{tpu_custom_call.1} parent=1 // pred_check_branch
      %42 = sbr.rel (0) target = $region25
    $region24: #{tpu_custom_call.1} parent=1 // pred_region
      %43 = dma.done [#allocation7], 2048
    $region25: #{tpu_custom_call.1} parent=1 // pred_fallthru
      _
    %p44 = scmp.eq.s32.totalorder 0, 0
    // Predicated region
    $region26: #{tpu_custom_call.1} parent=1 // pred_check
      %p45 = pneg %p44
    $region27: #{tpu_custom_call.1} parent=1 // pred_check_branch
      %47 = sbr.rel (%p45) target = $region29
    $region28: #{tpu_custom_call.1} parent=1 // pred_region
      %48 = vst [vmem:[#allocation2] sm:$0xff] 0.0
    $region29: #{tpu_custom_call.1} parent=1 // pred_fallthru
      _
    %v49 = vld [vmem:[#allocation2] sm:$0xff]
    %v50 = vld [vmem:[#allocation3] sm:$0xff]
    %v51 = vld [vmem:[#allocation6] sm:$0xff]
    %v52 = vld [vmem:[#allocation6 + $0x8] sm:$0xff]
    %v53 = vld [vmem:[#allocation6 + $0x10] sm:$0xff]
    %v54 = vld [vmem:[#allocation6 + $0x18] sm:$0xff]
    %v55 = vld [vmem:[#allocation6 + $0x20] sm:$0xff]
    %v56 = vld [vmem:[#allocation6 + $0x28] sm:$0xff]
    %v57 = vld [vmem:[#allocation6 + $0x30] sm:$0xff]
    %v58 = vld [vmem:[#allocation6 + $0x38] sm:$0xff]
    %v59 = vld [vmem:[#allocation6 + $0x40] sm:$0xff]
    %v60 = vld [vmem:[#allocation6 + $0x48] sm:$0xff]
    %v61 = vld [vmem:[#allocation6 + $0x50] sm:$0xff]
    %v62 = vld [vmem:[#allocation6 + $0x58] sm:$0xff]
    %v63 = vld [vmem:[#allocation6 + $0x60] sm:$0xff]
    %v64 = vld [vmem:[#allocation6 + $0x68] sm:$0xff]
    %v65 = vld [vmem:[#allocation6 + $0x70] sm:$0xff]
    %v66 = vld [vmem:[#allocation6 + $0x78] sm:$0xff]
    %67 = vmatprep.subr.mxu0 0.0
    %68 = vmatpush1.xpose.msra.mxu0 %v51
    %69 = vmatprep.subr.mxu0 0.0
    %70 = vmatpush1.xpose.msra.mxu0 %v52
    %71 = vmatprep.subr.mxu0 0.0
    %72 = vmatpush1.xpose.msra.mxu0 %v53
    %73 = vmatprep.subr.mxu0 0.0
    %74 = vmatpush1.xpose.msra.mxu0 %v54
    %75 = vmatprep.subr.mxu0 0.0
    %76 = vmatpush1.xpose.msra.mxu0 %v55
    %77 = vmatprep.subr.mxu0 0.0
    %78 = vmatpush1.xpose.msra.mxu0 %v56
    %79 = vmatprep.subr.mxu0 0.0
    %80 = vmatpush1.xpose.msra.mxu0 %v57
    %81 = vmatprep.subr.mxu0 0.0
    %82 = vmatpush1.xpose.msra.mxu0 %v58
    %83 = vmatprep.subr.mxu0 0.0
    %84 = vmatpush1.xpose.msra.mxu0 %v59
    %85 = vmatprep.subr.mxu0 0.0
    %86 = vmatpush1.xpose.msra.mxu0 %v60
    %87 = vmatprep.subr.mxu0 0.0
    %88 = vmatpush1.xpose.msra.mxu0 %v61
    %89 = vmatprep.subr.mxu0 0.0
    %90 = vmatpush1.xpose.msra.mxu0 %v62
    %91 = vmatprep.subr.mxu0 0.0
    %92 = vmatpush1.xpose.msra.mxu0 %v63
    %93 = vmatprep.subr.mxu0 0.0
    %94 = vmatpush1.xpose.msra.mxu0 %v64
    %95 = vmatprep.subr.mxu0 0.0
    %96 = vmatpush1.xpose.msra.mxu0 %v65
    %97 = vmatprep.subr.mxu0 0.0
    %98 = vmatpush1.xpose.msra.mxu0 %v66
    %99 = vmatprep.subr.mxu0 0.0
    %100 = vmatpush1.xpose.msra.mxu0 0.0
    %101 = vmatprep.subr.mxu0 0.0
    %102 = vmatpush1.xpose.msra.mxu0 0.0
    %103 = vmatprep.subr.mxu0 0.0
    %104 = vmatpush1.xpose.msra.mxu0 0.0
    %105 = vmatprep.subr.mxu0 0.0
    %106 = vmatpush1.xpose.msra.mxu0 0.0
    %107 = vmatprep.subr.mxu0 0.0
    %108 = vmatpush1.xpose.msra.mxu0 0.0
    %109 = vmatprep.subr.mxu0 0.0
    %110 = vmatpush1.xpose.msra.mxu0 0.0
    %111 = vmatprep.subr.mxu0 0.0
    %112 = vmatpush1.xpose.msra.mxu0 0.0
    %113 = vmatprep.subr.mxu0 0.0
    %114 = vmatpush1.xpose.msra.mxu0 0.0
    %115 = vmatprep.subr.mxu0 0.0
    %116 = vmatpush1.xpose.msra.mxu0 0.0
    %117 = vmatprep.subr.mxu0 0.0
    %118 = vmatpush1.xpose.msra.mxu0 0.0
    %119 = vmatprep.subr.mxu0 0.0
    %120 = vmatpush1.xpose.msra.mxu0 0.0
    %121 = vmatprep.subr.mxu0 0.0
    %122 = vmatpush1.xpose.msra.mxu0 0.0
    %123 = vmatprep.subr.mxu0 0.0
    %124 = vmatpush1.xpose.msra.mxu0 0.0
    %125 = vmatprep.subr.mxu0 0.0
    %126 = vmatpush1.xpose.msra.mxu0 0.0
    %127 = vmatprep.subr.mxu0 0.0
    %128 = vmatpush1.xpose.msra.mxu0 0.0
    %129 = vmatprep.subr.mxu0 0.0
    %130 = vmatpush1.xpose.msra.mxu0 0.0
    %131 = vmatprep.mubr.f32.mxu0 0.0
    %132 = vmatmul.mubr.f32.gmra.mrb[0].mxu0 %v50
    %v133 = vpop.f32.mrb[0].mxu0
    %v134 = vadd.f32 0.0, %v133
    %v135 = vpop.f32.mrb[0].mxu0
    %136 = vdwg.mxu0
    %v137 = vadd.f32 %v49, %v134
    %138 = vst [vmem:[#allocation2] sm:$0xff] %v137
    // Predicated region
    $region30: #{tpu_custom_call.1} parent=1 // pred_check
      %p139 = pneg %p44
    $region31: #{tpu_custom_call.1} parent=1 // pred_check_branch
      %141 = sbr.rel (%p139) target = $region33
    $region32: #{tpu_custom_call.1} parent=1 // pred_region
      %v142 = vld [vmem:[#allocation2] sm:$0xff]
      %v143 = vld [vmem:[%s2] sm:$0x1]
      %v145 = vlaneseq
      %v146 = vshrl.u32 %v145, 7
      %v147 = vsub.s32 0, %v146
      %v148 = vrot.slane %v143, %v147
      %v150 = vadd.f32 %v142, %v148
      %v151 = vld [vmem:[%s3] sm:$0x1]
      %vm152 = vcmp.eq.s32.totalorder %v151, 0
      %v153 = vsel %vm152, 1, 0
      %v154 = vlaneseq
      %v155 = vshrl.u32 %v154, 7
      %v156 = vsub.s32 0, %v155
      %v157 = vrot.slane %v153, %v156
      %vm158 = vcmp.eq.s32.totalorder %v157, 1
      %v159 = vsel %vm158, -1000.0, %v150
      %160 = vst [vmem:[#allocation8] sm:$0xff] %v159
    $region33: #{tpu_custom_call.1} parent=1 // pred_fallthru
      _
    // Predicated region
    $region34: #{tpu_custom_call.1} parent=1 // pred_check
      _
    $region35: #{tpu_custom_call.1} parent=1 // pred_check_branch
      %162 = sbr.rel (0) target = $region37
    $region36: #{tpu_custom_call.1} parent=1 // pred_region
      %s164 = ssub.s32 128, 128
      %165 = vsyncadd [#allocation5], %s164
      %s167 = sshll.u32 [#allocation8], 4
      %s168 = int_to_ptr.vmem [resolvable:$true] %s167
      %170 = dma.vmem_to_hbm [thread:$0]  %s168, 128, %s4, [#allocation5]
    $region37: #{tpu_custom_call.1} parent=1 // pred_fallthru
      _
    // Predicated region
    $region38: #{tpu_custom_call.1} parent=1 // pred_check
      _
    $region39: #{tpu_custom_call.1} parent=1 // pred_check_branch
      %172 = sbr.rel (0) target = $region41
    $region40: #{tpu_custom_call.1} parent=1 // pred_region
      %173 = dma.done [#allocation5], 128
    $region41: #{tpu_custom_call.1} parent=1 // pred_fallthru
      _
    %174 = vsyncpa [#allocation4], 1
    %175 = vsyncpa [#allocation7], 1
    %176 = vsyncpa [#allocation5], 1

</llo_original>
